<compile_context>
chip_gen: v7x
topology: tpu7x:2x2x1
jax: 0.10.0
libtpu: 0.0.40
codegen_flags: <defaults>
</compile_context>

<pallas_src>
import functools
import math

import jax
import jax.numpy as jnp
from jax.experimental import pallas as pl
from jax.experimental.pallas import tpu as pltpu


def _round_up(n: int, m: int) -> int:
    return ((n + m - 1) // m) * m


def _stable_softplus(z):
    # softplus(z) = log(1 + exp(z)); written without log1p for portable
    # Mosaic lowering, fp32-accurate at the tolerances used here.
    return jnp.maximum(z, 0.0) + jnp.log(1.0 + jnp.exp(-jnp.abs(z)))


def _policy_kernel(xe_ref, w1_ref, b1_ref, w2_ref, b2_ref, w3_ref, b3_ref,
                   out_ref, *, action_dim, padw, max_action, mxu_dtype,
                   get_logprob):
    f32 = jnp.float32
    A = action_dim

    xe = xe_ref[...]
    eps = xe[:, :padw]          # lane-dense: eps in lanes [0, A), zeros above
    x = xe[:, padw:]            # (bt, state_dim), starts on a vreg boundary

    # ---- 3-layer MLP, MXU matmuls with f32 accumulation -------------------
    # Weights are already in `mxu_dtype` (pre-cast once in the wrapper).
    h = jnp.dot(x.astype(mxu_dtype), w1_ref[...], preferred_element_type=f32)
    h = jnp.maximum(h + b1_ref[...], 0.0)
    h = jnp.dot(h.astype(mxu_dtype), w2_ref[...], preferred_element_type=f32)
    h = jnp.maximum(h + b2_ref[...], 0.0)
    ml = jnp.dot(h.astype(mxu_dtype), w3_ref[...], preferred_element_type=f32)
    ml = ml + b3_ref[...]                    # (bt, padw): [mu | logstd | 0..]

    # ---- tanh-Gaussian head: full-width math, no narrow lane slices -------
    # Align logstd (lanes [A,2A)) with mu (lanes [0,A)) via an XLU rotate.
    # Padding lanes stay finite (clip bounds exp; zero eps) and are masked
    # out at the end, so full-width VPU/EUP work is safe.
    logstd = jnp.clip(pltpu.roll(ml, shift=padw - A, axis=1), -20.0, 2.0)
    std = jnp.exp(logstd)                    # lanes [0, A) valid
    pre = ml + std * eps                     # lanes [0, A): mu + std*eps
    action = jnp.tanh(pre) * max_action      # lanes [0, A) valid
    mean = jnp.tanh(ml) * max_action         # lanes [0, A) valid (tanh(mu))
    mean_sh = pltpu.roll(mean, shift=A, axis=1)   # move to lanes [A, 2A)

    lane = jax.lax.broadcasted_iota(jnp.int32, ml.shape, 1)
    if get_logprob:
        # log N(pre | mu, std) = -0.5*eps^2 - logstd - 0.5*log(2*pi)
        normal_lp = -0.5 * eps * eps - logstd - 0.5 * math.log(2.0 * math.pi)
        # tanh log|det J| = 2*(log 2 - pre - softplus(-2*pre))
        log_det = 2.0 * (math.log(2.0) - pre - _stable_softplus(-2.0 * pre))
        lp_terms = jnp.where(lane < A, normal_lp - log_det, 0.0)
        logprob = jnp.sum(lp_terms, axis=-1, keepdims=True)        # (bt, 1)
        tail = jnp.where(lane == 2 * A, logprob, 0.0)
    else:
        tail = jnp.zeros_like(ml)

    # Single unmasked lane-dense store: [action | mean | logprob | 0 ...]
    slab = jnp.where(lane < A, action, jnp.where(lane < 2 * A, mean_sh, tail))
    out_ref[...] = slab.astype(out_ref.dtype)


def policy_forward(x, eps, params, *, action_dim, max_action,
                   get_logprob=True, batch_tile=512, use_bf16_matmul=False):
    """Pallas forward of Policy. Returns (action, logprob, mean).

    x:   (B, state_dim) observations
    eps: (B, action_dim) standard-normal noise used by Normal.rsample
    params: (w1, b1, w2, b2, w3, b3) with w: (in, out), b: (out,)
    """
    w1, b1, w2, b2, w3, b3 = params
    B, S = x.shape
    H1 = w1.shape[1]
    H2 = w2.shape[1]
    A = action_dim
    assert w3.shape[1] == 2 * A
    assert batch_tile % 8 == 0

    # Lane-dense zero-padding of the head layer: last MXU pass writes a full
    # 128-lane slab and the padding lanes of `ml` are exactly zero.
    padw = _round_up(2 * A + 1, 128)
    w3p = jnp.zeros((H2, padw), w3.dtype).at[:, :2 * A].set(w3)
    b3p = jnp.zeros((1, padw), jnp.float32).at[:, :2 * A].set(
        b3.reshape(1, -1).astype(jnp.float32))
    b1r = b1.reshape(1, H1).astype(jnp.float32)
    b2r = b2.reshape(1, H2).astype(jnp.float32)

    # bf16 MXU path: cast weights ONCE here (not per grid step inside the
    # kernel); biases / activations / head math stay f32.
    if use_bf16_matmul:
        mxu_dtype = jnp.bfloat16
        w1c, w2c, w3c = (w1.astype(mxu_dtype), w2.astype(mxu_dtype),
                         w3p.astype(mxu_dtype))
    else:
        mxu_dtype = jnp.float32
        w1c, w2c, w3c = (w1.astype(jnp.float32), w2.astype(jnp.float32),
                         w3p.astype(jnp.float32))

    # One merged per-row input: [eps padded to `padw` lanes | x].  Single DMA
    # per grid step; eps view is lane-dense and pre-aligned with mu.
    eps_p = jnp.zeros((B, padw), jnp.float32).at[:, :A].set(
        eps.astype(jnp.float32))
    xe = jnp.concatenate([eps_p, x.astype(jnp.float32)], axis=1)  # (B,padw+S)

    # Batch tiling: "parallel" axis, weights resident across batch tiles.
    bt8 = _round_up(B, 8)
    bt = min(batch_tile, bt8)
    # v7x has 2 TensorCores: guarantee >= 2 grid steps once the batch is big
    # enough that splitting keeps the MXU M-fill at >= 128 rows.
    if bt8 >= 256 and pl.cdiv(bt8, bt) < 2:
        bt = _round_up(pl.cdiv(bt8, 2), 8)
    Bp = _round_up(B, bt)
    if Bp != B:
        xe = jnp.pad(xe, ((0, Bp - B), (0, 0)))
    grid = (Bp // bt,)

    kernel = functools.partial(
        _policy_kernel, action_dim=A, padw=padw,
        max_action=float(max_action), mxu_dtype=mxu_dtype,
        get_logprob=bool(get_logprob))

    def batch_spec(cols):
        return pl.BlockSpec((bt, cols), lambda i: (i, 0))

    def resident(shape):
        # index_map ignores the batch grid index -> block stays in VMEM.
        return pl.BlockSpec(shape, lambda i: (0, 0))

    out = pl.pallas_call(
        kernel,
        out_shape=jax.ShapeDtypeStruct((Bp, padw), jnp.float32),
        grid_spec=pltpu.PrefetchScalarGridSpec(
            num_scalar_prefetch=0,
            grid=grid,
            in_specs=[
                batch_spec(padw + S),     # [eps_padded | x]
                resident((S, H1)),        # W1
                resident((1, H1)),        # b1
                resident((H1, H2)),       # W2
                resident((1, H2)),        # b2
                resident((H2, padw)),     # W3 (lane-padded)
                resident((1, padw)),      # b3 (lane-padded)
            ],
            out_specs=batch_spec(padw),
        ),
        compiler_params=pltpu.CompilerParams(
            dimension_semantics=("parallel",)),
    )(xe, w1c, b1r, w2c, b2r, w3c, b3p)

    action = out[:B, 0:A]
    mean = out[:B, A:2 * A]
    logprob = out[:B, 2 * A:2 * A + 1] if get_logprob else None
    return action, logprob, mean


def init_params(key, state_dim, action_dim, hidden):
    """Deterministic params for MLPNetwork(state_dim, 2*action_dim, hidden)."""
    dims = [state_dim, hidden, hidden, 2 * action_dim]
    params = []
    for i in range(3):
        key, kw, kb = jax.random.split(key, 3)
        w = jax.random.normal(kw, (dims[i], dims[i + 1]), jnp.float32)
        w = w / jnp.sqrt(float(dims[i]))
        b = 0.05 * jax.random.normal(kb, (dims[i + 1],), jnp.float32)
        params.extend([w, b])
    return tuple(params)


def reference_forward(x, eps, params, action_dim, max_action):
    """Pure-JAX reference matching the PyTorch Policy.forward semantics."""
    w1, b1, w2, b2, w3, b3 = params
    h = jnp.maximum(x @ w1 + b1, 0.0)
    h = jnp.maximum(h @ w2 + b2, 0.0)
    ml = h @ w3 + b3
    mu = ml[:, :action_dim]
    logstd = jnp.clip(ml[:, action_dim:], -20.0, 2.0)
    std = jnp.exp(logstd)
    pre = mu + std * eps
    action = jnp.tanh(pre) * max_action
    mean = jnp.tanh(mu) * max_action
    normal_lp = -0.5 * eps * eps - logstd - 0.5 * math.log(2.0 * math.pi)
    log_det = 2.0 * (math.log(2.0) - pre - _stable_softplus(-2.0 * pre))
    logprob = jnp.sum(normal_lp - log_det, axis=-1, keepdims=True)
    return action, logprob, mean


if __name__ == "__main__":
    batch = 8
    state_dim = 16
    action_dim = 4
    hidden_size = [256, 256]   # module default; MLPNetwork uses hidden_size[0]
    max_action = 2.0

    key = jax.random.PRNGKey(0)
    k_x, k_eps, k_p = jax.random.split(key, 3)
    x = jax.random.normal(k_x, (batch, state_dim), dtype=jnp.float32)
    eps = jax.random.normal(k_eps, (batch, action_dim), dtype=jnp.float32)
    params = init_params(k_p, state_dim, action_dim, hidden_size[0])

    # --- f32 path: exact-semantics check against the pure-JAX reference ----
    action, logprob, mean = policy_forward(
        x, eps, params, action_dim=action_dim, max_action=max_action,
        get_logprob=True)
    jax.block_until_ready((action, logprob, mean))

    ref_action, ref_logprob, ref_mean = reference_forward(
        x, eps, params, action_dim, max_action)

    assert action.shape == (batch, action_dim)
    assert mean.shape == (batch, action_dim)
    assert logprob.shape == (batch, 1)
    assert jnp.allclose(action, ref_action, atol=1e-4, rtol=1e-4)
    assert jnp.allclose(mean, ref_mean, atol=1e-4, rtol=1e-4)
    assert jnp.allclose(logprob, ref_logprob, atol=1e-4, rtol=1e-4)

    # --- get_logprob=False path: logprob math compiled out, returns None ---
    a2, lp2, m2 = policy_forward(x, eps, params, action_dim=action_dim,
                                 max_action=max_action, get_logprob=False)
    jax.block_until_ready((a2, m2))
    assert lp2 is None
    assert jnp.allclose(a2, ref_action, atol=1e-4, rtol=1e-4)
    assert jnp.allclose(m2, ref_mean, atol=1e-4, rtol=1e-4)

    # --- bf16-MXU path (v6e/v7x fast path): runs clean, finite outputs -----
    a3, lp3, m3 = policy_forward(x, eps, params, action_dim=action_dim,
                                 max_action=max_action, get_logprob=True,
                                 use_bf16_matmul=True)
    jax.block_until_ready((a3, lp3, m3))
    assert a3.shape == (batch, action_dim) and m3.shape == (batch, action_dim)
    assert lp3.shape == (batch, 1)
    assert bool(jnp.all(jnp.isfinite(a3)) & jnp.all(jnp.isfinite(m3))
                & jnp.all(jnp.isfinite(lp3)))

    print("KERNEL_OK")
</pallas_src>

<mosaic_0001>
module attributes {stable_mosaic.version = 11 : i64} {
  func.func @_policy_kernel(%arg0: i32, %arg1: memref<8x144xf32, #tpu.memory_space<vmem>>, %arg2: memref<16x256xf32, #tpu.memory_space<vmem>>, %arg3: memref<1x256xf32, #tpu.memory_space<vmem>>, %arg4: memref<256x256xf32, #tpu.memory_space<vmem>>, %arg5: memref<1x256xf32, #tpu.memory_space<vmem>>, %arg6: memref<256x128xf32, #tpu.memory_space<vmem>>, %arg7: memref<1x128xf32, #tpu.memory_space<vmem>>, %arg8: memref<8x128xf32, #tpu.memory_space<vmem>>) attributes {dimension_semantics = [#tpu.dimension_semantics<parallel>], iteration_bounds = array<i64: 1>, scalar_prefetch = 0 : i64, scratch_operands = 0 : i64, tpu.core_type = #tpu.core_type<tc>, window_params = [{transform_indices = @transform_0, window_bounds = array<i64: 8, 144>}, {pipeline_mode = #tpu.pipeline_mode<synchronous>, transform_indices = @transform_1, window_bounds = array<i64: 16, 256>}, {pipeline_mode = #tpu.pipeline_mode<synchronous>, transform_indices = @transform_2, window_bounds = array<i64: 1, 256>}, {pipeline_mode = #tpu.pipeline_mode<synchronous>, transform_indices = @transform_3, window_bounds = array<i64: 256, 256>}, {pipeline_mode = #tpu.pipeline_mode<synchronous>, transform_indices = @transform_4, window_bounds = array<i64: 1, 256>}, {pipeline_mode = #tpu.pipeline_mode<synchronous>, transform_indices = @transform_5, window_bounds = array<i64: 256, 128>}, {pipeline_mode = #tpu.pipeline_mode<synchronous>, transform_indices = @transform_6, window_bounds = array<i64: 1, 128>}, {transform_indices = @transform_7, window_bounds = array<i64: 8, 128>}]} {
    %c0 = arith.constant 0 : index
    %c0_0 = arith.constant 0 : index
    %0 = vector.load %arg1[%c0, %c0_0] : memref<8x144xf32, #tpu.memory_space<vmem>>, vector<8x144xf32>
    %1 = vector.extract_strided_slice %0 {offsets = [0, 0], sizes = [8, 128], strides = [1, 1]} : vector<8x144xf32> to vector<8x128xf32>
    %2 = vector.extract_strided_slice %0 {offsets = [0, 128], sizes = [8, 16], strides = [1, 1]} : vector<8x144xf32> to vector<8x16xf32>
    %c0_1 = arith.constant 0 : index
    %c0_2 = arith.constant 0 : index
    %3 = vector.load %arg2[%c0_1, %c0_2] : memref<16x256xf32, #tpu.memory_space<vmem>>, vector<16x256xf32>
    %cst = arith.constant dense<0.000000e+00> : vector<8x256xf32>
    %4 = tpu.matmul %2, %3, %cst {dimension_numbers = #tpu.dot_dimension_numbers<[1], [0], [0], [1], [0, 0, 1, 1], [], []>} : vector<8x16xf32>, vector<16x256xf32>, vector<8x256xf32> -> vector<8x256xf32>
    %c0_3 = arith.constant 0 : index
    %c0_4 = arith.constant 0 : index
    %5 = vector.load %arg3[%c0_3, %c0_4] : memref<1x256xf32, #tpu.memory_space<vmem>>, vector<1x256xf32>
    %6 = vector.broadcast %5 : vector<1x256xf32> to vector<8x256xf32>
    %7 = arith.addf %4, %6 : vector<8x256xf32>
    %cst_5 = arith.constant 0.000000e+00 : f32
    %8 = vector.broadcast %cst_5 : f32 to vector<8x256xf32>
    %9 = arith.maximumf %7, %8 : vector<8x256xf32>
    %c0_6 = arith.constant 0 : index
    %c0_7 = arith.constant 0 : index
    %10 = vector.load %arg4[%c0_6, %c0_7] : memref<256x256xf32, #tpu.memory_space<vmem>>, vector<256x256xf32>
    %cst_8 = arith.constant dense<0.000000e+00> : vector<8x256xf32>
    %11 = tpu.matmul %9, %10, %cst_8 {dimension_numbers = #tpu.dot_dimension_numbers<[1], [0], [0], [1], [0, 0, 1, 1], [], []>} : vector<8x256xf32>, vector<256x256xf32>, vector<8x256xf32> -> vector<8x256xf32>
    %c0_9 = arith.constant 0 : index
    %c0_10 = arith.constant 0 : index
    %12 = vector.load %arg5[%c0_9, %c0_10] : memref<1x256xf32, #tpu.memory_space<vmem>>, vector<1x256xf32>
    %13 = vector.broadcast %12 : vector<1x256xf32> to vector<8x256xf32>
    %14 = arith.addf %11, %13 : vector<8x256xf32>
    %cst_11 = arith.constant 0.000000e+00 : f32
    %15 = vector.broadcast %cst_11 : f32 to vector<8x256xf32>
    %16 = arith.maximumf %14, %15 : vector<8x256xf32>
    %c0_12 = arith.constant 0 : index
    %c0_13 = arith.constant 0 : index
    %17 = vector.load %arg6[%c0_12, %c0_13] : memref<256x128xf32, #tpu.memory_space<vmem>>, vector<256x128xf32>
    %cst_14 = arith.constant dense<0.000000e+00> : vector<8x128xf32>
    %18 = tpu.matmul %16, %17, %cst_14 {dimension_numbers = #tpu.dot_dimension_numbers<[1], [0], [0], [1], [0, 0, 1, 1], [], []>} : vector<8x256xf32>, vector<256x128xf32>, vector<8x128xf32> -> vector<8x128xf32>
    %c0_15 = arith.constant 0 : index
    %c0_16 = arith.constant 0 : index
    %19 = vector.load %arg7[%c0_15, %c0_16] : memref<1x128xf32, #tpu.memory_space<vmem>>, vector<1x128xf32>
    %20 = vector.broadcast %19 : vector<1x128xf32> to vector<8x128xf32>
    %21 = arith.addf %18, %20 : vector<8x128xf32>
    %c124_i32 = arith.constant 124 : i32
    %22 = tpu.dynamic_rotate %21 by %c124_i32 dim 1 : vector<8x128xf32>, i32 -> vector<8x128xf32>
    %cst_17 = arith.constant -2.000000e+01 : f32
    %cst_18 = arith.constant 2.000000e+00 : f32
    %23 = vector.broadcast %cst_17 : f32 to vector<8x128xf32>
    %24 = arith.maximumf %23, %22 : vector<8x128xf32>
    %25 = vector.broadcast %cst_18 : f32 to vector<8x128xf32>
    %26 = arith.minimumf %25, %24 : vector<8x128xf32>
    %27 = math.exp %26 : vector<8x128xf32>
    %28 = arith.mulf %27, %1 : vector<8x128xf32>
    %29 = arith.addf %21, %28 : vector<8x128xf32>
    %30 = math.tanh %29 : vector<8x128xf32>
    %cst_19 = arith.constant 2.000000e+00 : f32
    %31 = vector.broadcast %cst_19 : f32 to vector<8x128xf32>
    %32 = arith.mulf %30, %31 : vector<8x128xf32>
    %33 = math.tanh %21 : vector<8x128xf32>
    %cst_20 = arith.constant 2.000000e+00 : f32
    %34 = vector.broadcast %cst_20 : f32 to vector<8x128xf32>
    %35 = arith.mulf %33, %34 : vector<8x128xf32>
    %c4_i32 = arith.constant 4 : i32
    %36 = tpu.dynamic_rotate %35 by %c4_i32 dim 1 : vector<8x128xf32>, i32 -> vector<8x128xf32>
    %37 = tpu.iota {dimensions = array<i32: 1>} : vector<8x128xi32>
    %cst_21 = arith.constant -5.000000e-01 : f32
    %38 = vector.broadcast %cst_21 : f32 to vector<8x128xf32>
    %39 = arith.mulf %38, %1 : vector<8x128xf32>
    %40 = arith.mulf %39, %1 : vector<8x128xf32>
    %41 = arith.subf %40, %26 : vector<8x128xf32>
    %cst_22 = arith.constant 0.918938517 : f32
    %42 = vector.broadcast %cst_22 : f32 to vector<8x128xf32>
    %43 = arith.subf %41, %42 : vector<8x128xf32>
    %cst_23 = arith.constant 0.693147182 : f32
    %44 = vector.broadcast %cst_23 : f32 to vector<8x128xf32>
    %45 = arith.subf %44, %29 : vector<8x128xf32>
    %cst_24 = arith.constant -2.000000e+00 : f32
    %46 = vector.broadcast %cst_24 : f32 to vector<8x128xf32>
    %47 = arith.mulf %46, %29 : vector<8x128xf32>
    %cst_25 = arith.constant 0.000000e+00 : f32
    %48 = vector.broadcast %cst_25 : f32 to vector<8x128xf32>
    %49 = arith.maximumf %47, %48 : vector<8x128xf32>
    %50 = math.absf %47 : vector<8x128xf32>
    %cst_26 = arith.constant 0.000000e+00 : f32
    %51 = vector.broadcast %cst_26 : f32 to vector<8x128xf32>
    %52 = arith.subf %51, %50 : vector<8x128xf32>
    %53 = math.exp %52 : vector<8x128xf32>
    %cst_27 = arith.constant 1.000000e+00 : f32
    %54 = vector.broadcast %cst_27 : f32 to vector<8x128xf32>
    %55 = arith.addf %54, %53 : vector<8x128xf32>
    %56 = math.log %55 : vector<8x128xf32>
    %57 = arith.addf %49, %56 : vector<8x128xf32>
    %58 = arith.subf %45, %57 : vector<8x128xf32>
    %cst_28 = arith.constant 2.000000e+00 : f32
    %59 = vector.broadcast %cst_28 : f32 to vector<8x128xf32>
    %60 = arith.mulf %59, %58 : vector<8x128xf32>
    %c4_i32_29 = arith.constant 4 : i32
    %61 = vector.broadcast %c4_i32_29 : i32 to vector<8x128xi32>
    %62 = arith.cmpi slt, %37, %61 : vector<8x128xi32>
    %63 = arith.subf %43, %60 : vector<8x128xf32>
    %cst_30 = arith.constant 0.000000e+00 : f32
    %64 = vector.broadcast %cst_30 : f32 to vector<8x128xf32>
    %65 = arith.select %62, %63, %64 : vector<8x128xi1>, vector<8x128xf32>
    %cst_31 = arith.constant dense<0.000000e+00> : vector<8xf32>
    %66 = vector.multi_reduction <add>, %65, %cst_31 [1] : vector<8x128xf32> to vector<8xf32>
    %67 = vector.shape_cast %66 : vector<8xf32> to vector<8x1xf32>
    %c8_i32 = arith.constant 8 : i32
    %68 = vector.broadcast %c8_i32 : i32 to vector<8x128xi32>
    %69 = arith.cmpi eq, %37, %68 : vector<8x128xi32>
    %cst_32 = arith.constant 0.000000e+00 : f32
    %70 = vector.shape_cast %67 : vector<8x1xf32> to vector<8x1xf32>
    %71 = vector.broadcast %70 : vector<8x1xf32> to vector<8x128xf32>
    %72 = vector.broadcast %cst_32 : f32 to vector<8x128xf32>
    %73 = arith.select %69, %71, %72 : vector<8x128xi1>, vector<8x128xf32>
    %c4_i32_33 = arith.constant 4 : i32
    %74 = vector.broadcast %c4_i32_33 : i32 to vector<8x128xi32>
    %75 = arith.cmpi slt, %37, %74 : vector<8x128xi32>
    %c8_i32_34 = arith.constant 8 : i32
    %76 = vector.broadcast %c8_i32_34 : i32 to vector<8x128xi32>
    %77 = arith.cmpi slt, %37, %76 : vector<8x128xi32>
    %78 = arith.select %77, %36, %73 : vector<8x128xi1>, vector<8x128xf32>
    %79 = arith.select %75, %32, %78 : vector<8x128xi1>, vector<8x128xf32>
    %c0_35 = arith.constant 0 : index
    %c0_36 = arith.constant 0 : index
    %80 = vector.load %arg8[%c0_35, %c0_36] : memref<8x128xf32, #tpu.memory_space<vmem>>, vector<8x128xf32>
    tpu.vector_store %arg8[%c0_35, %c0_36], %79 {strides = array<i32>} : memref<8x128xf32, #tpu.memory_space<vmem>>, vector<8x128xf32>,
    return
  }
  func.func @transform_0(%arg0: i32) -> (i32, i32) {
    %c0_i32 = arith.constant 0 : i32
    %c0_i32_0 = arith.constant 0 : i32
    return %arg0, %c0_i32 : i32, i32
  }
  func.func @transform_1(%arg0: i32) -> (i32, i32) {
    %c0_i32 = arith.constant 0 : i32
    %c0_i32_0 = arith.constant 0 : i32
    %c0_i32_1 = arith.constant 0 : i32
    return %c0_i32, %c0_i32_0 : i32, i32
  }
  func.func @transform_2(%arg0: i32) -> (i32, i32) {
    %c0_i32 = arith.constant 0 : i32
    %c0_i32_0 = arith.constant 0 : i32
    %c0_i32_1 = arith.constant 0 : i32
    return %c0_i32, %c0_i32_0 : i32, i32
  }
  func.func @transform_3(%arg0: i32) -> (i32, i32) {
    %c0_i32 = arith.constant 0 : i32
    %c0_i32_0 = arith.constant 0 : i32
    %c0_i32_1 = arith.constant 0 : i32
    return %c0_i32, %c0_i32_0 : i32, i32
  }
  func.func @transform_4(%arg0: i32) -> (i32, i32) {
    %c0_i32 = arith.constant 0 : i32
    %c0_i32_0 = arith.constant 0 : i32
    %c0_i32_1 = arith.constant 0 : i32
    return %c0_i32, %c0_i32_0 : i32, i32
  }
  func.func @transform_5(%arg0: i32) -> (i32, i32) {
    %c0_i32 = arith.constant 0 : i32
    %c0_i32_0 = arith.constant 0 : i32
    %c0_i32_1 = arith.constant 0 : i32
    return %c0_i32, %c0_i32_0 : i32, i32
  }
  func.func @transform_6(%arg0: i32) -> (i32, i32) {
    %c0_i32 = arith.constant 0 : i32
    %c0_i32_0 = arith.constant 0 : i32
    %c0_i32_1 = arith.constant 0 : i32
    return %c0_i32, %c0_i32_0 : i32, i32
  }
  func.func @transform_7(%arg0: i32) -> (i32, i32) {
    %c0_i32 = arith.constant 0 : i32
    %c0_i32_0 = arith.constant 0 : i32
    return %arg0, %c0_i32 : i32, i32
  }
}

</mosaic_0001>

<llo_original>
// kernel: tpu_custom_call.1
$region0: #{tpu_custom_call.1}
  #allocation0 [shape = 'u32[]', space=smem, size = 0x4, offset = 0x4, fixed_abs, tag = 'smem constant byte address 0x4 - core index']
  #allocation1 [shape = 'u32[144,128]{1,0:T(1,128)}', space=vmem, size = 0x12000, scoped, tag = 'internal scratch']
  %s0 = inlined_call_operand.hbm [shape: f32[8,144], index: 0, kind: input, shape index: {}]
  %s1 = inlined_call_operand.hbm [shape: f32[16,256], index: 1, kind: input, shape index: {}]
  %s2 = inlined_call_operand.vmem [shape: f32[1,256], index: 2, kind: input, shape index: {}]
  %s3 = inlined_call_operand.hbm [shape: f32[256,256], index: 3, kind: input, shape index: {}]
  %s4 = inlined_call_operand.vmem [shape: f32[1,256], index: 4, kind: input, shape index: {}]
  %s5 = inlined_call_operand.hbm [shape: f32[256,128], index: 5, kind: input, shape index: {}]
  %s6 = inlined_call_operand.vmem [shape: f32[1,128], index: 6, kind: input, shape index: {}]
  %s7 = inlined_call_operand.hbm [shape: f32[8,128], index: 7, kind: output, shape index: {}]
  %s8 = sld [smem:[#allocation0]]
  $region54: #{tpu_custom_call.1} parent=0
    _
  %s10 = ssub.s32 1, %s8
  %s11 = scalar_select 0, %s10, %s8
  $region1: #{tpu_custom_call.1} parent=0
    #allocation2 [shape = 'u8[8192]{0}', space=vmem, size = 0x2000, scoped, tag = 'input window, operand 0, single buffered']
    #allocation3 [shape = 's32[1]{0}', space=sflag, size = 0x4, scoped, tag = 'scoped memory for tpu_custom_call.1']
    #allocation4 [shape = 's32[1]{0}', space=sflag, size = 0x4, scoped, tag = 'scoped memory for tpu_custom_call.1']
    #allocation5 [shape = 'u8[16384]{0}', space=vmem, size = 0x4000, scoped, tag = 'input window, operand 1, single buffered']
    #allocation6 [shape = 's32[1]{0}', space=sflag, size = 0x4, scoped, tag = 'scoped memory for tpu_custom_call.1']
    #allocation7 [shape = 'u8[262144]{0}', space=vmem, size = 0x40000, scoped, tag = 'input window, operand 3, single buffered']
    #allocation8 [shape = 'u8[131072]{0}', space=vmem, size = 0x20000, scoped, tag = 'input window, operand 5, single buffered']
    #allocation9 [shape = 's32[1]{0}', space=sflag, size = 0x4, scoped, tag = 'scoped memory for tpu_custom_call.1']
    #allocation10 [shape = 'u8[4096]{0}', space=vmem, size = 0x1000, scoped, tag = 'output window, operand 0, single buffered']
    %12 = vsyncpa [#allocation3], 0
    %13 = vsyncpa [#allocation6], 0
    %14 = vsyncpa [#allocation9], 0
    %15 = vsyncpa [#allocation4], 0
    // Predicated region
    $region2: #{tpu_custom_call.1} parent=1 // pred_check
      _
    $region3: #{tpu_custom_call.1} parent=1 // pred_check_branch
      %17 = sbr.rel (0) target = $region5
    $region4: #{tpu_custom_call.1} parent=1 // pred_region
      %s19 = ssub.s32 256, 256
      %20 = vsyncadd [#allocation3], %s19
      %s22 = sshll.u32 [#allocation2], 4
      %s23 = int_to_ptr.vmem [resolvable:$true] %s22
      %25 = dma.hbm_to_vmem [thread:$0]  %s0, 256, %s23, [#allocation3]
    $region5: #{tpu_custom_call.1} parent=1 // pred_fallthru
      _
    // Predicated region
    $region6: #{tpu_custom_call.1} parent=1 // pred_check
      _
    $region7: #{tpu_custom_call.1} parent=1 // pred_check_branch
      %27 = sbr.rel (0) target = $region9
    $region8: #{tpu_custom_call.1} parent=1 // pred_region
      %s29 = ssub.s32 512, 512
      %30 = vsyncadd [#allocation6], %s29
      %s31 = sshll.u32 [#allocation5], 4
      %s32 = int_to_ptr.vmem [resolvable:$true] %s31
      %37 = dma.hbm_to_vmem [thread:$0]  %s1, 512, %s32, [#allocation6], 256, 256, 16
    $region9: #{tpu_custom_call.1} parent=1 // pred_fallthru
      _
    // Predicated region
    $region10: #{tpu_custom_call.1} parent=1 // pred_check
      _
    $region11: #{tpu_custom_call.1} parent=1 // pred_check_branch
      %39 = sbr.rel (0) target = $region13
    $region12: #{tpu_custom_call.1} parent=1 // pred_region
      _
    $region13: #{tpu_custom_call.1} parent=1 // pred_fallthru
      _
    // Predicated region
    $region14: #{tpu_custom_call.1} parent=1 // pred_check
      _
    $region15: #{tpu_custom_call.1} parent=1 // pred_check_branch
      %41 = sbr.rel (0) target = $region17
    $region16: #{tpu_custom_call.1} parent=1 // pred_region
      %s43 = ssub.s32 8192, 8192
      %44 = vsyncadd [#allocation6], %s43
      %s45 = sshll.u32 [#allocation7], 4
      %s46 = int_to_ptr.vmem [resolvable:$true] %s45
      %51 = dma.hbm_to_vmem [thread:$0]  %s3, 8192, %s46, [#allocation6], 256, 256, 16
    $region17: #{tpu_custom_call.1} parent=1 // pred_fallthru
      _
    // Predicated region
    $region18: #{tpu_custom_call.1} parent=1 // pred_check
      _
    $region19: #{tpu_custom_call.1} parent=1 // pred_check_branch
      %53 = sbr.rel (0) target = $region21
    $region20: #{tpu_custom_call.1} parent=1 // pred_region
      _
    $region21: #{tpu_custom_call.1} parent=1 // pred_fallthru
      _
    // Predicated region
    $region22: #{tpu_custom_call.1} parent=1 // pred_check
      _
    $region23: #{tpu_custom_call.1} parent=1 // pred_check_branch
      %55 = sbr.rel (0) target = $region25
    $region24: #{tpu_custom_call.1} parent=1 // pred_region
      %s57 = ssub.s32 4096, 4096
      %58 = vsyncadd [#allocation9], %s57
      %s59 = sshll.u32 [#allocation8], 4
      %s60 = int_to_ptr.vmem [resolvable:$true] %s59
      %65 = dma.hbm_to_vmem [thread:$0]  %s5, 4096, %s60, [#allocation9], 128, 128, 8
    $region25: #{tpu_custom_call.1} parent=1 // pred_fallthru
      _
    // Predicated region
    $region26: #{tpu_custom_call.1} parent=1 // pred_check
      _
    $region27: #{tpu_custom_call.1} parent=1 // pred_check_branch
      %67 = sbr.rel (0) target = $region29
    $region28: #{tpu_custom_call.1} parent=1 // pred_region
      _
    $region29: #{tpu_custom_call.1} parent=1 // pred_fallthru
      _
    // Predicated region
    $region30: #{tpu_custom_call.1} parent=1 // pred_check
      _
    $region31: #{tpu_custom_call.1} parent=1 // pred_check_branch
      %69 = sbr.rel (0) target = $region33
    $region32: #{tpu_custom_call.1} parent=1 // pred_region
      %70 = dma.done [#allocation3], 256
    $region33: #{tpu_custom_call.1} parent=1 // pred_fallthru
      _
    // Predicated region
    $region34: #{tpu_custom_call.1} parent=1 // pred_check
      _
    $region35: #{tpu_custom_call.1} parent=1 // pred_check_branch
      %72 = sbr.rel (0) target = $region37
    $region36: #{tpu_custom_call.1} parent=1 // pred_region
      %73 = dma.done [#allocation6], 512
    $region37: #{tpu_custom_call.1} parent=1 // pred_fallthru
      _
    // Predicated region
    $region38: #{tpu_custom_call.1} parent=1 // pred_check
      _
    $region39: #{tpu_custom_call.1} parent=1 // pred_check_branch
      %75 = sbr.rel (0) target = $region41
    $region40: #{tpu_custom_call.1} parent=1 // pred_region
      %76 = dma.done [#allocation6], 8192
    $region41: #{tpu_custom_call.1} parent=1 // pred_fallthru
      _
    // Predicated region
    $region42: #{tpu_custom_call.1} parent=1 // pred_check
      _
    $region43: #{tpu_custom_call.1} parent=1 // pred_check_branch
      %78 = sbr.rel (0) target = $region45
    $region44: #{tpu_custom_call.1} parent=1 // pred_region
      %79 = dma.done [#allocation9], 4096
    $region45: #{tpu_custom_call.1} parent=1 // pred_fallthru
      _
    %v80 = vld [vmem:[#allocation2] sm:$0xff]
    %v81 = vld [vmem:[#allocation2 + $0x8] sm:$0xff]
    %v82 = vld [vmem:[#allocation5] sm:$0xff]
    %v83 = vld [vmem:[#allocation5 + $0x8] sm:$0xff]
    %v84 = vld [vmem:[#allocation5 + $0x10] sm:$0xff]
    %v85 = vld [vmem:[#allocation5 + $0x18] sm:$0xff]
    %v86 = vld [vmem:[%s2] sm:$0x3]
    %v88 = vlaneseq
    %v89 = vshrl.u32 %v88, 7
    %v90 = vsub.s32 0, %v89
    %v91 = vrot.slane %v86, %v90
    %v92 = vlaneseq
    %v93 = vshrl.u32 %v92, 7
    %v94 = vsub.s32 1, %v93
    %v95 = vrot.slane %v86, %v94
    %vm98 = vcmask 130048
    %v100 = vsel %vm98, %v81, 0
    %102 = vmatprep.subr.mxu0 %v83
    %103 = vmatpush1.msra.mxu0 %v82
    %104 = vmatprep.subr.mxu0 %v85
    %105 = vmatpush1.msra.mxu0 %v84
    %106 = vmatprep.subr.mxu0 0.0
    %107 = vmatpush1.msra.mxu0 0.0
    %108 = vmatprep.subr.mxu0 0.0
    %109 = vmatpush1.msra.mxu0 0.0
    %110 = vmatprep.subr.mxu0 0.0
    %111 = vmatpush1.msra.mxu0 0.0
    %112 = vmatprep.subr.mxu0 0.0
    %113 = vmatpush1.msra.mxu0 0.0
    %114 = vmatprep.subr.mxu0 0.0
    %115 = vmatpush1.msra.mxu0 0.0
    %116 = vmatprep.subr.mxu0 0.0
    %117 = vmatpush1.msra.mxu0 0.0
    %118 = vmatprep.subr.mxu0 0.0
    %119 = vmatpush1.msra.mxu0 0.0
    %120 = vmatprep.subr.mxu0 0.0
    %121 = vmatpush1.msra.mxu0 0.0
    %122 = vmatprep.subr.mxu0 0.0
    %123 = vmatpush1.msra.mxu0 0.0
    %124 = vmatprep.subr.mxu0 0.0
    %125 = vmatpush1.msra.mxu0 0.0
    %126 = vmatprep.subr.mxu0 0.0
    %127 = vmatpush1.msra.mxu0 0.0
    %128 = vmatprep.subr.mxu0 0.0
    %129 = vmatpush1.msra.mxu0 0.0
    %130 = vmatprep.subr.mxu0 0.0
    %131 = vmatpush1.msra.mxu0 0.0
    %132 = vmatprep.subr.mxu0 0.0
    %133 = vmatpush1.msra.mxu0 0.0
    %134 = vmatprep.subr.mxu0 0.0
    %135 = vmatpush1.msra.mxu0 0.0
    %136 = vmatprep.subr.mxu0 0.0
    %137 = vmatpush1.msra.mxu0 0.0
    %138 = vmatprep.subr.mxu0 0.0
    %139 = vmatpush1.msra.mxu0 0.0
    %140 = vmatprep.subr.mxu0 0.0
    %141 = vmatpush1.msra.mxu0 0.0
    %142 = vmatprep.subr.mxu0 0.0
    %143 = vmatpush1.msra.mxu0 0.0
    %144 = vmatprep.subr.mxu0 0.0
    %145 = vmatpush1.msra.mxu0 0.0
    %146 = vmatprep.subr.mxu0 0.0
    %147 = vmatpush1.msra.mxu0 0.0
    %148 = vmatprep.subr.mxu0 0.0
    %149 = vmatpush1.msra.mxu0 0.0
    %150 = vmatprep.subr.mxu0 0.0
    %151 = vmatpush1.msra.mxu0 0.0
    %152 = vmatprep.subr.mxu0 0.0
    %153 = vmatpush1.msra.mxu0 0.0
    %154 = vmatprep.subr.mxu0 0.0
    %155 = vmatpush1.msra.mxu0 0.0
    %156 = vmatprep.subr.mxu0 0.0
    %157 = vmatpush1.msra.mxu0 0.0
    %158 = vmatprep.subr.mxu0 0.0
    %159 = vmatpush1.msra.mxu0 0.0
    %160 = vmatprep.subr.mxu0 0.0
    %161 = vmatpush1.msra.mxu0 0.0
    %162 = vmatprep.subr.mxu0 0.0
    %163 = vmatpush1.msra.mxu0 0.0
    %164 = vmatprep.subr.mxu0 0.0
    %165 = vmatpush1.msra.mxu0 0.0
    %166 = vmatprep.mubr.f32.mxu0 0.0
    %167 = vmatmul.mubr.f32.gmra.mrb[0].mxu0 %v100
    %v168 = vpop.f32.mrb[0].mxu0
    %v169 = vadd.f32 %v91, %v168
    %v170 = vpop.f32.mrb[0].mxu0
    %v171 = vadd.f32 %v95, %v170
    %172 = vdwg.mxu0
    %v173 = vmax.f32 %v169, 0.0
    %v174 = vmax.f32 %v171, 0.0
    %v175 = vld [vmem:[#allocation7] sm:$0xff]
    %v176 = vld [vmem:[#allocation7 + $0x8] sm:$0xff]
    %v177 = vld [vmem:[#allocation7 + $0x10] sm:$0xff]
    %v178 = vld [vmem:[#allocation7 + $0x18] sm:$0xff]
    %v179 = vld [vmem:[#allocation7 + $0x20] sm:$0xff]
    %v180 = vld [vmem:[#allocation7 + $0x28] sm:$0xff]
    %v181 = vld [vmem:[#allocation7 + $0x30] sm:$0xff]
    %v182 = vld [vmem:[#allocation7 + $0x38] sm:$0xff]
    %v183 = vld [vmem:[#allocation7 + $0x40] sm:$0xff]
    %v184 = vld [vmem:[#allocation7 + $0x48] sm:$0xff]
    %v185 = vld [vmem:[#allocation7 + $0x50] sm:$0xff]
    %v186 = vld [vmem:[#allocation7 + $0x58] sm:$0xff]
    %v187 = vld [vmem:[#allocation7 + $0x60] sm:$0xff]
    %v188 = vld [vmem:[#allocation7 + $0x68] sm:$0xff]
    %v189 = vld [vmem:[#allocation7 + $0x70] sm:$0xff]
    %v190 = vld [vmem:[#allocation7 + $0x78] sm:$0xff]
    %v191 = vld [vmem:[#allocation7 + $0x80] sm:$0xff]
    %v192 = vld [vmem:[#allocation7 + $0x88] sm:$0xff]
    %v193 = vld [vmem:[#allocation7 + $0x90] sm:$0xff]
    %v194 = vld [vmem:[#allocation7 + $0x98] sm:$0xff]
    %v195 = vld [vmem:[#allocation7 + $0xa0] sm:$0xff]
    %v196 = vld [vmem:[#allocation7 + $0xa8] sm:$0xff]
    %v197 = vld [vmem:[#allocation7 + $0xb0] sm:$0xff]
    %v198 = vld [vmem:[#allocation7 + $0xb8] sm:$0xff]
    %v199 = vld [vmem:[#allocation7 + $0xc0] sm:$0xff]
    %v200 = vld [vmem:[#allocation7 + $0xc8] sm:$0xff]
    %v201 = vld [vmem:[#allocation7 + $0xd0] sm:$0xff]
    %v202 = vld [vmem:[#allocation7 + $0xd8] sm:$0xff]
    %v203 = vld [vmem:[#allocation7 + $0xe0] sm:$0xff]
    %v204 = vld [vmem:[#allocation7 + $0xe8] sm:$0xff]
    %v205 = vld [vmem:[#allocation7 + $0xf0] sm:$0xff]
    %v206 = vld [vmem:[#allocation7 + $0xf8] sm:$0xff]
    %v207 = vld [vmem:[#allocation7 + $0x100] sm:$0xff]
    %v208 = vld [vmem:[#allocation7 + $0x108] sm:$0xff]
    %v209 = vld [vmem:[#allocation7 + $0x110] sm:$0xff]
    %v210 = vld [vmem:[#allocation7 + $0x118] sm:$0xff]
    %v211 = vld [vmem:[#allocation7 + $0x120] sm:$0xff]
    %v212 = vld [vmem:[#allocation7 + $0x128] sm:$0xff]
    %v213 = vld [vmem:[#allocation7 + $0x130] sm:$0xff]
    %v214 = vld [vmem:[#allocation7 + $0x138] sm:$0xff]
    %v215 = vld [vmem:[#allocation7 + $0x140] sm:$0xff]
    %v216 = vld [vmem:[#allocation7 + $0x148] sm:$0xff]
    %v217 = vld [vmem:[#allocation7 + $0x150] sm:$0xff]
    %v218 = vld [vmem:[#allocation7 + $0x158] sm:$0xff]
    %v219 = vld [vmem:[#allocation7 + $0x160] sm:$0xff]
    %v220 = vld [vmem:[#allocation7 + $0x168] sm:$0xff]
    %v221 = vld [vmem:[#allocation7 + $0x170] sm:$0xff]
    %v222 = vld [vmem:[#allocation7 + $0x178] sm:$0xff]
    %v223 = vld [vmem:[#allocation7 + $0x180] sm:$0xff]
    %v224 = vld [vmem:[#allocation7 + $0x188] sm:$0xff]
    %v225 = vld [vmem:[#allocation7 + $0x190] sm:$0xff]
    %v226 = vld [vmem:[#allocation7 + $0x198] sm:$0xff]
    %v227 = vld [vmem:[#allocation7 + $0x1a0] sm:$0xff]
    %v228 = vld [vmem:[#allocation7 + $0x1a8] sm:$0xff]
    %v229 = vld [vmem:[#allocation7 + $0x1b0] sm:$0xff]
    %v230 = vld [vmem:[#allocation7 + $0x1b8] sm:$0xff]
    %v231 = vld [vmem:[#allocation7 + $0x1c0] sm:$0xff]
    %v232 = vld [vmem:[#allocation7 + $0x1c8] sm:$0xff]
    %v233 = vld [vmem:[#allocation7 + $0x1d0] sm:$0xff]
    %v234 = vld [vmem:[#allocation7 + $0x1d8] sm:$0xff]
    %v235 = vld [vmem:[#allocation7 + $0x1e0] sm:$0xff]
    %v236 = vld [vmem:[#allocation7 + $0x1e8] sm:$0xff]
    %v237 = vld [vmem:[#allocation7 + $0x1f0] sm:$0xff]
    %v238 = vld [vmem:[#allocation7 + $0x1f8] sm:$0xff]
    %v239 = vld [vmem:[%s4] sm:$0x3]
    %v241 = vlaneseq
    %v242 = vshrl.u32 %v241, 7
    %v243 = vsub.s32 0, %v242
    %v244 = vrot.slane %v239, %v243
    %v245 = vlaneseq
    %v246 = vshrl.u32 %v245, 7
    %v247 = vsub.s32 1, %v246
    %v248 = vrot.slane %v239, %v247
    %251 = vmatprep.subr.mxu0 %v176
    %252 = vmatpush1.msra.mxu0 %v175
    %253 = vmatprep.subr.mxu0 %v178
    %254 = vmatpush1.msra.mxu0 %v177
    %255 = vmatprep.subr.mxu0 %v180
    %256 = vmatpush1.msra.mxu0 %v179
    %257 = vmatprep.subr.mxu0 %v182
    %258 = vmatpush1.msra.mxu0 %v181
    %259 = vmatprep.subr.mxu0 %v184
    %260 = vmatpush1.msra.mxu0 %v183
    %261 = vmatprep.subr.mxu0 %v186
    %262 = vmatpush1.msra.mxu0 %v185
    %263 = vmatprep.subr.mxu0 %v188
    %264 = vmatpush1.msra.mxu0 %v187
    %265 = vmatprep.subr.mxu0 %v190
    %266 = vmatpush1.msra.mxu0 %v189
    %267 = vmatprep.subr.mxu0 %v192
    %268 = vmatpush1.msra.mxu0 %v191
    %269 = vmatprep.subr.mxu0 %v194
    %270 = vmatpush1.msra.mxu0 %v193
    %271 = vmatprep.subr.mxu0 %v196
    %272 = vmatpush1.msra.mxu0 %v195
    %273 = vmatprep.subr.mxu0 %v198
    %274 = vmatpush1.msra.mxu0 %v197
    %275 = vmatprep.subr.mxu0 %v200
    %276 = vmatpush1.msra.mxu0 %v199
    %277 = vmatprep.subr.mxu0 %v202
    %278 = vmatpush1.msra.mxu0 %v201
    %279 = vmatprep.subr.mxu0 %v204
    %280 = vmatpush1.msra.mxu0 %v203
    %281 = vmatprep.subr.mxu0 %v206
    %282 = vmatpush1.msra.mxu0 %v205
    %283 = vmatprep.subr.mxu0 %v208
    %284 = vmatpush1.msra.mxu0 %v207
    %285 = vmatprep.subr.mxu0 %v210
    %286 = vmatpush1.msra.mxu0 %v209
    %287 = vmatprep.subr.mxu0 %v212
    %288 = vmatpush1.msra.mxu0 %v211
    %289 = vmatprep.subr.mxu0 %v214
    %290 = vmatpush1.msra.mxu0 %v213
    %291 = vmatprep.subr.mxu0 %v216
    %292 = vmatpush1.msra.mxu0 %v215
    %293 = vmatprep.subr.mxu0 %v218
    %294 = vmatpush1.msra.mxu0 %v217
    %295 = vmatprep.subr.mxu0 %v220
    %296 = vmatpush1.msra.mxu0 %v219
    %297 = vmatprep.subr.mxu0 %v222
    %298 = vmatpush1.msra.mxu0 %v221
    %299 = vmatprep.subr.mxu0 %v224
    %300 = vmatpush1.msra.mxu0 %v223
    %301 = vmatprep.subr.mxu0 %v226
    %302 = vmatpush1.msra.mxu0 %v225
    %303 = vmatprep.subr.mxu0 %v228
    %304 = vmatpush1.msra.mxu0 %v227
    %305 = vmatprep.subr.mxu0 %v230
    %306 = vmatpush1.msra.mxu0 %v229
    %307 = vmatprep.subr.mxu0 %v232
    %308 = vmatpush1.msra.mxu0 %v231
    %309 = vmatprep.subr.mxu0 %v234
    %310 = vmatpush1.msra.mxu0 %v233
    %311 = vmatprep.subr.mxu0 %v236
    %312 = vmatpush1.msra.mxu0 %v235
    %313 = vmatprep.subr.mxu0 %v238
    %314 = vmatpush1.msra.mxu0 %v237
    %315 = vmatprep.mubr.f32.mxu0 %v174
    %316 = vmatmul.mubr.f32.gmra.mrb[0].mxu0 %v173
    %v317 = vpop.f32.mrb[0].mxu0
    %v318 = vadd.f32 %v244, %v317
    %v319 = vpop.f32.mrb[0].mxu0
    %v320 = vadd.f32 %v248, %v319
    %321 = vdwg.mxu0
    %v322 = vmax.f32 %v318, 0.0
    %v323 = vmax.f32 %v320, 0.0
    %v324 = vld [vmem:[#allocation8] sm:$0xff]
    %v325 = vld [vmem:[#allocation8 + $0x8] sm:$0xff]
    %v326 = vld [vmem:[#allocation8 + $0x10] sm:$0xff]
    %v327 = vld [vmem:[#allocation8 + $0x18] sm:$0xff]
    %v328 = vld [vmem:[#allocation8 + $0x20] sm:$0xff]
    %v329 = vld [vmem:[#allocation8 + $0x28] sm:$0xff]
    %v330 = vld [vmem:[#allocation8 + $0x30] sm:$0xff]
    %v331 = vld [vmem:[#allocation8 + $0x38] sm:$0xff]
    %v332 = vld [vmem:[#allocation8 + $0x40] sm:$0xff]
    %v333 = vld [vmem:[#allocation8 + $0x48] sm:$0xff]
    %v334 = vld [vmem:[#allocation8 + $0x50] sm:$0xff]
    %v335 = vld [vmem:[#allocation8 + $0x58] sm:$0xff]
    %v336 = vld [vmem:[#allocation8 + $0x60] sm:$0xff]
    %v337 = vld [vmem:[#allocation8 + $0x68] sm:$0xff]
    %v338 = vld [vmem:[#allocation8 + $0x70] sm:$0xff]
    %v339 = vld [vmem:[#allocation8 + $0x78] sm:$0xff]
    %v340 = vld [vmem:[#allocation8 + $0x80] sm:$0xff]
    %v341 = vld [vmem:[#allocation8 + $0x88] sm:$0xff]
    %v342 = vld [vmem:[#allocation8 + $0x90] sm:$0xff]
    %v343 = vld [vmem:[#allocation8 + $0x98] sm:$0xff]
    %v344 = vld [vmem:[#allocation8 + $0xa0] sm:$0xff]
    %v345 = vld [vmem:[#allocation8 + $0xa8] sm:$0xff]
    %v346 = vld [vmem:[#allocation8 + $0xb0] sm:$0xff]
    %v347 = vld [vmem:[#allocation8 + $0xb8] sm:$0xff]
    %v348 = vld [vmem:[#allocation8 + $0xc0] sm:$0xff]
    %v349 = vld [vmem:[#allocation8 + $0xc8] sm:$0xff]
    %v350 = vld [vmem:[#allocation8 + $0xd0] sm:$0xff]
    %v351 = vld [vmem:[#allocation8 + $0xd8] sm:$0xff]
    %v352 = vld [vmem:[#allocation8 + $0xe0] sm:$0xff]
    %v353 = vld [vmem:[#allocation8 + $0xe8] sm:$0xff]
    %v354 = vld [vmem:[#allocation8 + $0xf0] sm:$0xff]
    %v355 = vld [vmem:[#allocation8 + $0xf8] sm:$0xff]
    %v356 = vld [vmem:[%s6] sm:$0x1]
    %v358 = vlaneseq
    %v359 = vshrl.u32 %v358, 7
    %v360 = vsub.s32 0, %v359
    %v361 = vrot.slane %v356, %v360
    %363 = vmatprep.subr.mxu0 0.0
    %364 = vmatpush1.msra.mxu0 %v324
    %365 = vmatprep.subr.mxu0 0.0
    %366 = vmatpush1.msra.mxu0 %v325
    %367 = vmatprep.subr.mxu0 0.0
    %368 = vmatpush1.msra.mxu0 %v326
    %369 = vmatprep.subr.mxu0 0.0
    %370 = vmatpush1.msra.mxu0 %v327
    %371 = vmatprep.subr.mxu0 0.0
    %372 = vmatpush1.msra.mxu0 %v328
    %373 = vmatprep.subr.mxu0 0.0
    %374 = vmatpush1.msra.mxu0 %v329
    %375 = vmatprep.subr.mxu0 0.0
    %376 = vmatpush1.msra.mxu0 %v330
    %377 = vmatprep.subr.mxu0 0.0
    %378 = vmatpush1.msra.mxu0 %v331
    %379 = vmatprep.subr.mxu0 0.0
    %380 = vmatpush1.msra.mxu0 %v332
    %381 = vmatprep.subr.mxu0 0.0
    %382 = vmatpush1.msra.mxu0 %v333
    %383 = vmatprep.subr.mxu0 0.0
    %384 = vmatpush1.msra.mxu0 %v334
    %385 = vmatprep.subr.mxu0 0.0
    %386 = vmatpush1.msra.mxu0 %v335
    %387 = vmatprep.subr.mxu0 0.0
    %388 = vmatpush1.msra.mxu0 %v336
    %389 = vmatprep.subr.mxu0 0.0
    %390 = vmatpush1.msra.mxu0 %v337
    %391 = vmatprep.subr.mxu0 0.0
    %392 = vmatpush1.msra.mxu0 %v338
    %393 = vmatprep.subr.mxu0 0.0
    %394 = vmatpush1.msra.mxu0 %v339
    %395 = vmatprep.subr.mxu0 0.0
    %396 = vmatpush1.msra.mxu0 %v340
    %397 = vmatprep.subr.mxu0 0.0
    %398 = vmatpush1.msra.mxu0 %v341
    %399 = vmatprep.subr.mxu0 0.0
    %400 = vmatpush1.msra.mxu0 %v342
    %401 = vmatprep.subr.mxu0 0.0
    %402 = vmatpush1.msra.mxu0 %v343
    %403 = vmatprep.subr.mxu0 0.0
    %404 = vmatpush1.msra.mxu0 %v344
    %405 = vmatprep.subr.mxu0 0.0
    %406 = vmatpush1.msra.mxu0 %v345
    %407 = vmatprep.subr.mxu0 0.0
    %408 = vmatpush1.msra.mxu0 %v346
    %409 = vmatprep.subr.mxu0 0.0
    %410 = vmatpush1.msra.mxu0 %v347
    %411 = vmatprep.subr.mxu0 0.0
    %412 = vmatpush1.msra.mxu0 %v348
    %413 = vmatprep.subr.mxu0 0.0
    %414 = vmatpush1.msra.mxu0 %v349
    %415 = vmatprep.subr.mxu0 0.0
    %416 = vmatpush1.msra.mxu0 %v350
    %417 = vmatprep.subr.mxu0 0.0
    %418 = vmatpush1.msra.mxu0 %v351
    %419 = vmatprep.subr.mxu0 0.0
    %420 = vmatpush1.msra.mxu0 %v352
    %421 = vmatprep.subr.mxu0 0.0
    %422 = vmatpush1.msra.mxu0 %v353
    %423 = vmatprep.subr.mxu0 0.0
    %424 = vmatpush1.msra.mxu0 %v354
    %425 = vmatprep.subr.mxu0 0.0
    %426 = vmatpush1.msra.mxu0 %v355
    %427 = vmatprep.mubr.f32.mxu0 %v323
    %428 = vmatmul.mubr.f32.gmra.mrb[0].mxu0 %v322
    %v429 = vpop.f32.mrb[0].mxu0
    %v430 = vadd.f32 %v361, %v429
    %v431 = vpop.f32.mrb[0].mxu0
    %432 = vdwg.mxu0
    %433 = vrot.lane.b32.xlu0 %v430, 124
    %v434 = vpop.permute.xlu0 %433
    %v435 = vmax.f32 %v434, -20.0
    %v436 = vmin.f32 %v435, 2.0
    %v437 = vmul.f32 %v436, 1.442695
    %v438 = vpow.pop %v437
    %v439 = vmul.f32 %v438, %v80
    %v440 = vadd.f32 %v430, %v439
    %v441 = vtanh.pop %v440
    %v442 = vmul.f32 %v441, 2.0
    %v443 = vtanh.pop %v430
    %v444 = vmul.f32 %v443, 2.0
    %445 = vrot.lane.b32.xlu0 %v444, 4
    %v446 = vpop.permute.xlu0 %445
    %v447 = vlaneseq
    %v448 = vand.u32 %v447, 127
    %v449 = vmul.f32 %v80, -0.5
    %v450 = vmul.f32 %v449, %v80
    %v451 = vsub.f32 %v450, %v436
    %v452 = vsub.f32 %v451, 0.9189385
    %v453 = vsub.f32 0.6931472, %v440
    %v454 = vmul.f32 %v440, -2.0
    %v455 = vmax.f32 %v454, 0.0
    %v456 = vand.u32 2147483647, %v454
    %v457 = vsub.f32 0.0, %v456
    %v458 = vmul.f32 %v457, 1.442695
    %v459 = vpow.pop %v458
    %v460 = vadd.f32 %v459, 1.0
    %v461 = vlog2.pop %v460
    %v462 = vmul.f32 %v461, 0.6931472
    %v463 = vadd.f32 %v455, %v462
    %v464 = vsub.f32 %v453, %v463
    %v465 = vmul.f32 %v464, 2.0
    %vm466 = vcmp.lt.s32.totalorder %v448, 4
    %v467 = vsub.f32 %v452, %v465
    %v468 = vsel %vm466, %v467, 0.0
    %469 = vadd.xlane.f32.xlu0 %v468
    %v470 = vpop.xlane.xlu0 %469
    %vm471 = vcmp.eq.s32.totalorder %v448, 8
    %v472 = vsel %vm471, %v470, 0.0
    %vm473 = vcmp.lt.s32.totalorder %v448, 8
    %v474 = vsel %vm473, %v446, %v472
    %v475 = vsel %vm466, %v442, %v474
    %476 = vst [vmem:[#allocation10] sm:$0xff] %v475
    // Predicated region
    $region46: #{tpu_custom_call.1} parent=1 // pred_check
      _
    $region47: #{tpu_custom_call.1} parent=1 // pred_check_branch
      %478 = sbr.rel (0) target = $region49
    $region48: #{tpu_custom_call.1} parent=1 // pred_region
      %s480 = ssub.s32 128, 128
      %481 = vsyncadd [#allocation4], %s480
      %s483 = sshll.u32 [#allocation10], 4
      %s484 = int_to_ptr.vmem [resolvable:$true] %s483
      %486 = dma.vmem_to_hbm [thread:$0]  %s484, 128, %s7, [#allocation4]
    $region49: #{tpu_custom_call.1} parent=1 // pred_fallthru
      _
    // Predicated region
    $region50: #{tpu_custom_call.1} parent=1 // pred_check
      _
    $region51: #{tpu_custom_call.1} parent=1 // pred_check_branch
      %488 = sbr.rel (0) target = $region53
    $region52: #{tpu_custom_call.1} parent=1 // pred_region
      %489 = dma.done [#allocation4], 128
    $region53: #{tpu_custom_call.1} parent=1 // pred_fallthru
      _
    %490 = vsyncpa [#allocation3], 1
    %491 = vsyncpa [#allocation6], 1
    %492 = vsyncpa [#allocation9], 1
    %493 = vsyncpa [#allocation4], 1

</llo_original>
